<compile_context>
chip_gen: v7x
topology: tpu7x:2x2x1
jax: 0.10.0
libtpu: 0.0.40
codegen_flags: <defaults>
</compile_context>

<pallas_src>
import functools

import jax
import jax.numpy as jnp
from jax.experimental import pallas as pl
from jax.experimental.pallas import tpu as pltpu

LANE = 128  # TPU lane width; pad all feature dims to a multiple of this.


def _round_up(n, m):
    return ((n + m - 1) // m) * m


def _pad2(a, rows, cols):
    r, c = a.shape
    return jnp.pad(a, ((0, rows - r), (0, cols - c)))


def _default_block_b():
    """v5e: 128 (saturates its 4x128x128 MXU, halves VMEM); v6e/v7x: 256."""
    try:
        kind = jax.devices()[0].device_kind.lower()
    except Exception:
        return 256
    if "v5 lite" in kind or "v5e" in kind or "v5lite" in kind:
        return 128
    return 256


def vae_kernel(x_ref, eps_ref,
               w1_ref, b1_ref, wh_ref, bh_ref,
               wd1_ref, bd1_ref, wd2_ref, bd2_ref,
               gen_ref, muvar_ref):
    # Elementwise math stays in f32; bf16 only at the MXU boundary.
    x = x_ref[...]

    # ---- Encoder: hidden = relu(x @ W1 + b1) ----
    h = jnp.dot(x.astype(jnp.bfloat16), w1_ref[...],
                preferred_element_type=jnp.float32) + b1_ref[...]
    h = jnp.maximum(h, 0.0)

    # ---- Fused mu | log-var head: one matmul, one wide lane-dense store ----
    muvar = jnp.dot(h.astype(jnp.bfloat16), wh_ref[...],
                    preferred_element_type=jnp.float32) + bh_ref[...]
    lp = muvar.shape[-1] // 2          # static, 128-aligned split point
    mu = muvar[:, :lp]
    log_var = muvar[:, lp:]

    # ---- Reparameterize: z = eps * exp(logvar / 2) + mu (f32) ----
    z = eps_ref[...] * jnp.exp(log_var * 0.5) + mu

    # ---- Decoder ----
    h2 = jnp.dot(z.astype(jnp.bfloat16), wd1_ref[...],
                 preferred_element_type=jnp.float32) + bd1_ref[...]
    h2 = jnp.maximum(h2, 0.0)
    gen = jnp.dot(h2.astype(jnp.bfloat16), wd2_ref[...],
                  preferred_element_type=jnp.float32) + bd2_ref[...]

    gen_ref[...] = gen
    muvar_ref[...] = muvar


@functools.partial(jax.jit, static_argnames=("block_b",))
def _vae_forward_impl(x, params, eps, block_b):
    B, D = x.shape
    H = params["w1"].shape[1]
    L = params["wmu"].shape[1]

    Dp = _round_up(D, LANE)
    Hp = _round_up(H, LANE)
    Lp = _round_up(L, LANE)

    # ---- Batch tiling (review fix #2 / #4) ----
    # At least 2 grid steps when B >= 16 (v7x megacore), and tiles sized by
    # cdiv so padding waste is bounded by the 8-row sublane round-up.
    min_tiles = 2 if B >= 16 else 1
    num_tiles = max(pl.cdiv(B, block_b), min_tiles)
    TB = _round_up(pl.cdiv(B, num_tiles), 8)
    Bp = TB * num_tiles

    f32, bf16 = jnp.float32, jnp.bfloat16

    # Zero-pad activations (zero rows/cols propagate to zeros through the net).
    x_p = _pad2(x.astype(f32), Bp, Dp)
    eps_p = _pad2(eps.astype(f32), Bp, Lp)

    # Weights stored bf16 (halves VMEM/HBM traffic); biases stay f32.
    w1_p = _pad2(params["w1"], Dp, Hp).astype(bf16)
    b1_p = _pad2(params["b1"], 1, Hp).astype(f32)
    wh_p = jnp.concatenate([_pad2(params["wmu"], Hp, Lp),
                            _pad2(params["wvar"], Hp, Lp)], axis=1).astype(bf16)
    bh_p = jnp.concatenate([_pad2(params["bmu"], 1, Lp),
                            _pad2(params["bvar"], 1, Lp)], axis=1).astype(f32)
    wd1_p = _pad2(params["wd1"], Lp, Hp).astype(bf16)
    bd1_p = _pad2(params["bd1"], 1, Hp).astype(f32)
    wd2_p = _pad2(params["wd2"], Hp, Dp).astype(bf16)
    bd2_p = _pad2(params["bd2"], 1, Dp).astype(f32)

    def batch_spec(cols):            # blocked along batch, double-buffered pipeline
        return pl.BlockSpec((TB, cols), lambda i: (i, 0))

    def resident_spec(rows, cols):   # full block, constant index, single-buffered
        return pl.BlockSpec((rows, cols), lambda i: (0, 0),
                            pipeline_mode=pl.Buffered(1))

    in_specs = [
        batch_spec(Dp),               # x
        batch_spec(Lp),               # eps
        resident_spec(Dp, Hp),        # w1
        resident_spec(1, Hp),         # b1
        resident_spec(Hp, 2 * Lp),    # w_mu|var (fused)
        resident_spec(1, 2 * Lp),     # b_mu|var (fused)
        resident_spec(Lp, Hp),        # wd1
        resident_spec(1, Hp),         # bd1
        resident_spec(Hp, Dp),        # wd2
        resident_spec(1, Dp),         # bd2
    ]
    out_specs = (batch_spec(Dp), batch_spec(2 * Lp))
    out_shape = (jax.ShapeDtypeStruct((Bp, Dp), f32),
                 jax.ShapeDtypeStruct((Bp, 2 * Lp), f32))

    # ---- Explicit VMEM budget (review fix #3) ----
    weight_bytes = 2 * (Dp * Hp + Hp * 2 * Lp + Lp * Hp + Hp * Dp)   # bf16, 1-buffered
    bias_bytes = 4 * (Hp + 2 * Lp + Hp + Dp)                          # f32, 1-buffered
    io_tile_bytes = 4 * TB * (Dp + Lp + Dp + 2 * Lp)                  # x,eps,gen,muvar
    interm_bytes = 4 * TB * (Hp + 2 * Lp + Lp + Hp + Dp)              # h,muvar,z,h2,gen
    vmem_needed = weight_bytes + bias_bytes + 2 * io_tile_bytes + interm_bytes
    vmem_limit = min(max(int(1.5 * vmem_needed) + (2 << 20), 32 << 20), 128 << 20)

    # Advisory cost estimate for XLA scheduling.
    mxu_flops = 2 * Bp * (Dp * Hp + Hp * (2 * Lp) + Lp * Hp + Hp * Dp)
    weight_elems = Dp * Hp + Hp * (2 * Lp) + Lp * Hp + Hp * Dp
    act_out_elems = Bp * (Dp + Lp + Dp + 2 * Lp)
    bias_elems = Hp + 2 * Lp + Hp + Dp
    cost = pl.CostEstimate(
        flops=mxu_flops,
        transcendentals=Bp * Lp,
        bytes_accessed=4 * (act_out_elems + bias_elems) + 2 * weight_elems,
    )

    gen_p, muvar_p = pl.pallas_call(
        vae_kernel,
        out_shape=out_shape,
        grid=(num_tiles,),
        in_specs=in_specs,
        out_specs=out_specs,
        compiler_params=pltpu.CompilerParams(
            dimension_semantics=("parallel",),
            vmem_limit_bytes=vmem_limit),
        cost_estimate=cost,
    )(x_p, eps_p, w1_p, b1_p, wh_p, bh_p, wd1_p, bd1_p, wd2_p, bd2_p)

    gen = gen_p[:B, :D]
    mu = muvar_p[:B, :L]
    var = muvar_p[:B, Lp:Lp + L]
    return gen, mu, var


def vae_forward(x, params, eps, block_b=None):
    """Full VAE forward in one pipelined Pallas kernel.

    x: [B, input_dim] f32, eps: [B, latent_dim] f32 standard-normal draw.
    Returns (generated_x [B, D], z_mu [B, L], z_var [B, L]) in f32.
    `var` is the log-variance head output (as in the PyTorch module).
    """
    if block_b is None:
        block_b = _default_block_b()
    return _vae_forward_impl(x, params, eps, block_b)


def init_params(key, input_dim, hidden_dim, latent_dim):
    """PyTorch-Linear-style init (uniform +/- 1/sqrt(fan_in)).
    Weights stored as [in, out] (transposed relative to torch); biases [1, out]."""
    def linear(k, fan_in, fan_out):
        kw, kb = jax.random.split(k)
        bound = 1.0 / jnp.sqrt(fan_in)
        w = jax.random.uniform(kw, (fan_in, fan_out), jnp.float32, -bound, bound)
        b = jax.random.uniform(kb, (1, fan_out), jnp.float32, -bound, bound)
        return w, b

    k1, k2, k3, k4, k5 = jax.random.split(key, 5)
    w1, b1 = linear(k1, input_dim, hidden_dim)        # encoder.linear
    wmu, bmu = linear(k2, hidden_dim, latent_dim)     # encoder.mu
    wvar, bvar = linear(k3, hidden_dim, latent_dim)   # encoder.var
    wd1, bd1 = linear(k4, latent_dim, hidden_dim)     # decoder.latent_to_hidden
    wd2, bd2 = linear(k5, hidden_dim, input_dim)      # decoder.hidden_to_out
    return dict(w1=w1, b1=b1, wmu=wmu, bmu=bmu, wvar=wvar, bvar=bvar,
                wd1=wd1, bd1=bd1, wd2=wd2, bd2=bd2)


def reference_forward(x, p, eps):
    """Pure-JAX reference mirroring the kernel numerics (bf16 at the MXU
    boundary, f32 accumulation & elementwise)."""
    def dot_bf16(a, w):
        return jax.lax.dot(a.astype(jnp.bfloat16), w.astype(jnp.bfloat16),
                           preferred_element_type=jnp.float32)

    h = jnp.maximum(dot_bf16(x, p["w1"]) + p["b1"], 0.0)
    mu = dot_bf16(h, p["wmu"]) + p["bmu"]
    var = dot_bf16(h, p["wvar"]) + p["bvar"]
    z = eps * jnp.exp(var * 0.5) + mu
    h2 = jnp.maximum(dot_bf16(z, p["wd1"]) + p["bd1"], 0.0)
    gen = dot_bf16(h2, p["wd2"]) + p["bd2"]
    return gen, mu, var


if __name__ == "__main__":
    # Small shapes implied by the module's forward: x is [batch, input_dim].
    batch, input_dim, hidden_dim, latent_dim = 8, 64, 32, 16

    key = jax.random.PRNGKey(0)
    k_x, k_eps, k_params = jax.random.split(key, 3)

    x = jax.random.normal(k_x, (batch, input_dim), dtype=jnp.float32)
    # torch.randn_like(std) equivalent: standard-normal draw, supplied to the kernel.
    eps = jax.random.normal(k_eps, (batch, latent_dim), dtype=jnp.float32)
    params = init_params(k_params, input_dim, hidden_dim, latent_dim)

    gen, mu, var = vae_forward(x, params, eps)
    jax.block_until_ready((gen, mu, var))

    # Sanity check against a pure-JAX reference with matching numerics.
    gen_r, mu_r, var_r = reference_forward(x, params, eps)
    assert gen.shape == (batch, input_dim)
    assert mu.shape == (batch, latent_dim) and var.shape == (batch, latent_dim)
    assert jnp.allclose(gen, gen_r, atol=2e-3, rtol=2e-3)
    assert jnp.allclose(mu, mu_r, atol=2e-3, rtol=2e-3)
    assert jnp.allclose(var, var_r, atol=2e-3, rtol=2e-3)

    print("KERNEL_OK")
</pallas_src>

<mosaic_0001>
module attributes {stable_mosaic.version = 11 : i64} {
  func.func @vae_kernel(%arg0: i32, %arg1: memref<8x128xf32, #tpu.memory_space<vmem>>, %arg2: memref<8x128xf32, #tpu.memory_space<vmem>>, %arg3: memref<128x128xbf16, #tpu.memory_space<vmem>>, %arg4: memref<1x128xf32, #tpu.memory_space<vmem>>, %arg5: memref<128x256xbf16, #tpu.memory_space<vmem>>, %arg6: memref<1x256xf32, #tpu.memory_space<vmem>>, %arg7: memref<128x128xbf16, #tpu.memory_space<vmem>>, %arg8: memref<1x128xf32, #tpu.memory_space<vmem>>, %arg9: memref<128x128xbf16, #tpu.memory_space<vmem>>, %arg10: memref<1x128xf32, #tpu.memory_space<vmem>>, %arg11: memref<8x128xf32, #tpu.memory_space<vmem>>, %arg12: memref<8x256xf32, #tpu.memory_space<vmem>>) attributes {dimension_semantics = [#tpu.dimension_semantics<parallel>], iteration_bounds = array<i64: 1>, scalar_prefetch = 0 : i64, scratch_operands = 0 : i64, tpu.core_type = #tpu.core_type<tc>, window_params = [{transform_indices = @transform_0, window_bounds = array<i64: 8, 128>}, {transform_indices = @transform_1, window_bounds = array<i64: 8, 128>}, {pipeline_mode = #tpu.pipeline_mode<synchronous>, transform_indices = @transform_2, window_bounds = array<i64: 128, 128>}, {pipeline_mode = #tpu.pipeline_mode<synchronous>, transform_indices = @transform_3, window_bounds = array<i64: 1, 128>}, {pipeline_mode = #tpu.pipeline_mode<synchronous>, transform_indices = @transform_4, window_bounds = array<i64: 128, 256>}, {pipeline_mode = #tpu.pipeline_mode<synchronous>, transform_indices = @transform_5, window_bounds = array<i64: 1, 256>}, {pipeline_mode = #tpu.pipeline_mode<synchronous>, transform_indices = @transform_6, window_bounds = array<i64: 128, 128>}, {pipeline_mode = #tpu.pipeline_mode<synchronous>, transform_indices = @transform_7, window_bounds = array<i64: 1, 128>}, {pipeline_mode = #tpu.pipeline_mode<synchronous>, transform_indices = @transform_8, window_bounds = array<i64: 128, 128>}, {pipeline_mode = #tpu.pipeline_mode<synchronous>, transform_indices = @transform_9, window_bounds = array<i64: 1, 128>}, {transform_indices = @transform_10, window_bounds = array<i64: 8, 128>}, {transform_indices = @transform_11, window_bounds = array<i64: 8, 256>}]} {
    %c0 = arith.constant 0 : index
    %c0_0 = arith.constant 0 : index
    %0 = vector.load %arg1[%c0, %c0_0] : memref<8x128xf32, #tpu.memory_space<vmem>>, vector<8x128xf32>
    %1 = arith.truncf %0 : vector<8x128xf32> to vector<8x128xbf16>
    %c0_1 = arith.constant 0 : index
    %c0_2 = arith.constant 0 : index
    %2 = vector.load %arg3[%c0_1, %c0_2] : memref<128x128xbf16, #tpu.memory_space<vmem>>, vector<128x128xbf16>
    %cst = arith.constant dense<0.000000e+00> : vector<8x128xf32>
    %3 = tpu.matmul %1, %2, %cst {dimension_numbers = #tpu.dot_dimension_numbers<[1], [0], [0], [1], [0, 0, 1, 1], [], []>} : vector<8x128xbf16>, vector<128x128xbf16>, vector<8x128xf32> -> vector<8x128xf32>
    %c0_3 = arith.constant 0 : index
    %c0_4 = arith.constant 0 : index
    %4 = vector.load %arg4[%c0_3, %c0_4] : memref<1x128xf32, #tpu.memory_space<vmem>>, vector<1x128xf32>
    %5 = vector.broadcast %4 : vector<1x128xf32> to vector<8x128xf32>
    %6 = arith.addf %3, %5 : vector<8x128xf32>
    %cst_5 = arith.constant 0.000000e+00 : f32
    %7 = vector.broadcast %cst_5 : f32 to vector<8x128xf32>
    %8 = arith.maximumf %6, %7 : vector<8x128xf32>
    %9 = arith.truncf %8 : vector<8x128xf32> to vector<8x128xbf16>
    %c0_6 = arith.constant 0 : index
    %c0_7 = arith.constant 0 : index
    %10 = vector.load %arg5[%c0_6, %c0_7] : memref<128x256xbf16, #tpu.memory_space<vmem>>, vector<128x256xbf16>
    %cst_8 = arith.constant dense<0.000000e+00> : vector<8x256xf32>
    %11 = tpu.matmul %9, %10, %cst_8 {dimension_numbers = #tpu.dot_dimension_numbers<[1], [0], [0], [1], [0, 0, 1, 1], [], []>} : vector<8x128xbf16>, vector<128x256xbf16>, vector<8x256xf32> -> vector<8x256xf32>
    %c0_9 = arith.constant 0 : index
    %c0_10 = arith.constant 0 : index
    %12 = vector.load %arg6[%c0_9, %c0_10] : memref<1x256xf32, #tpu.memory_space<vmem>>, vector<1x256xf32>
    %13 = vector.broadcast %12 : vector<1x256xf32> to vector<8x256xf32>
    %14 = arith.addf %11, %13 : vector<8x256xf32>
    %15 = vector.extract_strided_slice %14 {offsets = [0, 0], sizes = [8, 128], strides = [1, 1]} : vector<8x256xf32> to vector<8x128xf32>
    %16 = vector.extract_strided_slice %14 {offsets = [0, 128], sizes = [8, 128], strides = [1, 1]} : vector<8x256xf32> to vector<8x128xf32>
    %c0_11 = arith.constant 0 : index
    %c0_12 = arith.constant 0 : index
    %17 = vector.load %arg2[%c0_11, %c0_12] : memref<8x128xf32, #tpu.memory_space<vmem>>, vector<8x128xf32>
    %cst_13 = arith.constant 5.000000e-01 : f32
    %18 = vector.broadcast %cst_13 : f32 to vector<8x128xf32>
    %19 = arith.mulf %16, %18 : vector<8x128xf32>
    %20 = math.exp %19 : vector<8x128xf32>
    %21 = arith.mulf %17, %20 : vector<8x128xf32>
    %22 = arith.addf %21, %15 : vector<8x128xf32>
    %23 = arith.truncf %22 : vector<8x128xf32> to vector<8x128xbf16>
    %c0_14 = arith.constant 0 : index
    %c0_15 = arith.constant 0 : index
    %24 = vector.load %arg7[%c0_14, %c0_15] : memref<128x128xbf16, #tpu.memory_space<vmem>>, vector<128x128xbf16>
    %cst_16 = arith.constant dense<0.000000e+00> : vector<8x128xf32>
    %25 = tpu.matmul %23, %24, %cst_16 {dimension_numbers = #tpu.dot_dimension_numbers<[1], [0], [0], [1], [0, 0, 1, 1], [], []>} : vector<8x128xbf16>, vector<128x128xbf16>, vector<8x128xf32> -> vector<8x128xf32>
    %c0_17 = arith.constant 0 : index
    %c0_18 = arith.constant 0 : index
    %26 = vector.load %arg8[%c0_17, %c0_18] : memref<1x128xf32, #tpu.memory_space<vmem>>, vector<1x128xf32>
    %27 = vector.broadcast %26 : vector<1x128xf32> to vector<8x128xf32>
    %28 = arith.addf %25, %27 : vector<8x128xf32>
    %cst_19 = arith.constant 0.000000e+00 : f32
    %29 = vector.broadcast %cst_19 : f32 to vector<8x128xf32>
    %30 = arith.maximumf %28, %29 : vector<8x128xf32>
    %31 = arith.truncf %30 : vector<8x128xf32> to vector<8x128xbf16>
    %c0_20 = arith.constant 0 : index
    %c0_21 = arith.constant 0 : index
    %32 = vector.load %arg9[%c0_20, %c0_21] : memref<128x128xbf16, #tpu.memory_space<vmem>>, vector<128x128xbf16>
    %cst_22 = arith.constant dense<0.000000e+00> : vector<8x128xf32>
    %33 = tpu.matmul %31, %32, %cst_22 {dimension_numbers = #tpu.dot_dimension_numbers<[1], [0], [0], [1], [0, 0, 1, 1], [], []>} : vector<8x128xbf16>, vector<128x128xbf16>, vector<8x128xf32> -> vector<8x128xf32>
    %c0_23 = arith.constant 0 : index
    %c0_24 = arith.constant 0 : index
    %34 = vector.load %arg10[%c0_23, %c0_24] : memref<1x128xf32, #tpu.memory_space<vmem>>, vector<1x128xf32>
    %35 = vector.broadcast %34 : vector<1x128xf32> to vector<8x128xf32>
    %36 = arith.addf %33, %35 : vector<8x128xf32>
    %c0_25 = arith.constant 0 : index
    %c0_26 = arith.constant 0 : index
    %37 = vector.load %arg11[%c0_25, %c0_26] : memref<8x128xf32, #tpu.memory_space<vmem>>, vector<8x128xf32>
    tpu.vector_store %arg11[%c0_25, %c0_26], %36 {strides = array<i32>} : memref<8x128xf32, #tpu.memory_space<vmem>>, vector<8x128xf32>,
    %c0_27 = arith.constant 0 : index
    %c0_28 = arith.constant 0 : index
    %38 = vector.load %arg12[%c0_27, %c0_28] : memref<8x256xf32, #tpu.memory_space<vmem>>, vector<8x256xf32>
    tpu.vector_store %arg12[%c0_27, %c0_28], %14 {strides = array<i32>} : memref<8x256xf32, #tpu.memory_space<vmem>>, vector<8x256xf32>,
    return
  }
  func.func @transform_0(%arg0: i32) -> (i32, i32) {
    %c0_i32 = arith.constant 0 : i32
    %c0_i32_0 = arith.constant 0 : i32
    return %arg0, %c0_i32 : i32, i32
  }
  func.func @transform_1(%arg0: i32) -> (i32, i32) {
    %c0_i32 = arith.constant 0 : i32
    %c0_i32_0 = arith.constant 0 : i32
    return %arg0, %c0_i32 : i32, i32
  }
  func.func @transform_2(%arg0: i32) -> (i32, i32) {
    %c0_i32 = arith.constant 0 : i32
    %c0_i32_0 = arith.constant 0 : i32
    %c0_i32_1 = arith.constant 0 : i32
    return %c0_i32, %c0_i32_0 : i32, i32
  }
  func.func @transform_3(%arg0: i32) -> (i32, i32) {
    %c0_i32 = arith.constant 0 : i32
    %c0_i32_0 = arith.constant 0 : i32
    %c0_i32_1 = arith.constant 0 : i32
    return %c0_i32, %c0_i32_0 : i32, i32
  }
  func.func @transform_4(%arg0: i32) -> (i32, i32) {
    %c0_i32 = arith.constant 0 : i32
    %c0_i32_0 = arith.constant 0 : i32
    %c0_i32_1 = arith.constant 0 : i32
    return %c0_i32, %c0_i32_0 : i32, i32
  }
  func.func @transform_5(%arg0: i32) -> (i32, i32) {
    %c0_i32 = arith.constant 0 : i32
    %c0_i32_0 = arith.constant 0 : i32
    %c0_i32_1 = arith.constant 0 : i32
    return %c0_i32, %c0_i32_0 : i32, i32
  }
  func.func @transform_6(%arg0: i32) -> (i32, i32) {
    %c0_i32 = arith.constant 0 : i32
    %c0_i32_0 = arith.constant 0 : i32
    %c0_i32_1 = arith.constant 0 : i32
    return %c0_i32, %c0_i32_0 : i32, i32
  }
  func.func @transform_7(%arg0: i32) -> (i32, i32) {
    %c0_i32 = arith.constant 0 : i32
    %c0_i32_0 = arith.constant 0 : i32
    %c0_i32_1 = arith.constant 0 : i32
    return %c0_i32, %c0_i32_0 : i32, i32
  }
  func.func @transform_8(%arg0: i32) -> (i32, i32) {
    %c0_i32 = arith.constant 0 : i32
    %c0_i32_0 = arith.constant 0 : i32
    %c0_i32_1 = arith.constant 0 : i32
    return %c0_i32, %c0_i32_0 : i32, i32
  }
  func.func @transform_9(%arg0: i32) -> (i32, i32) {
    %c0_i32 = arith.constant 0 : i32
    %c0_i32_0 = arith.constant 0 : i32
    %c0_i32_1 = arith.constant 0 : i32
    return %c0_i32, %c0_i32_0 : i32, i32
  }
  func.func @transform_10(%arg0: i32) -> (i32, i32) {
    %c0_i32 = arith.constant 0 : i32
    %c0_i32_0 = arith.constant 0 : i32
    return %arg0, %c0_i32 : i32, i32
  }
  func.func @transform_11(%arg0: i32) -> (i32, i32) {
    %c0_i32 = arith.constant 0 : i32
    %c0_i32_0 = arith.constant 0 : i32
    return %arg0, %c0_i32 : i32, i32
  }
}

</mosaic_0001>

<llo_original>
// kernel: _vae_forward_impl.1
$region0: #{_vae_forward_impl.1}
  #allocation0 [shape = 'u32[]', space=smem, size = 0x4, offset = 0x4, fixed_abs, tag = 'smem constant byte address 0x4 - core index']
  #allocation1 [shape = 'u32[144,128]{1,0:T(1,128)}', space=vmem, size = 0x12000, scoped, tag = 'internal scratch']
  %s0 = inlined_call_operand.vmem [shape: f32[8,128], index: 0, kind: input, shape index: {}]
  %s1 = inlined_call_operand.vmem [shape: f32[8,128], index: 1, kind: input, shape index: {}]
  %s2 = inlined_call_operand.vmem [shape: bf16[128,128], index: 2, kind: input, shape index: {}]
  %s3 = inlined_call_operand.vmem [shape: f32[1,128], index: 3, kind: input, shape index: {}]
  %s4 = inlined_call_operand.vmem [shape: bf16[128,256], index: 4, kind: input, shape index: {}]
  %s5 = inlined_call_operand.vmem [shape: f32[1,256], index: 5, kind: input, shape index: {}]
  %s6 = inlined_call_operand.vmem [shape: bf16[128,128], index: 6, kind: input, shape index: {}]
  %s7 = inlined_call_operand.vmem [shape: f32[1,128], index: 7, kind: input, shape index: {}]
  %s8 = inlined_call_operand.vmem [shape: bf16[128,128], index: 8, kind: input, shape index: {}]
  %s9 = inlined_call_operand.vmem [shape: f32[1,128], index: 9, kind: input, shape index: {}]
  %s10 = inlined_call_operand.hbm [shape: f32[8,128], index: 10, kind: output, shape index: {0}]
  %s11 = inlined_call_operand.vmem [shape: f32[8,256], index: 11, kind: output, shape index: {1}]
  %12 = xla_tuple %s10, %s11
  %s13 = sld [smem:[#allocation0]]
  $region58: #{_vae_forward_impl.1} parent=0
    _
  %s15 = ssub.s32 1, %s13
  %s16 = scalar_select 0, %s15, %s13
  $region1: #{_vae_forward_impl.1} parent=0
    #allocation2 [shape = 'u8[4096]{0}', space=vmem, size = 0x1000, scoped, tag = 'output window, operand 0, single buffered']
    #allocation3 [shape = 's32[1]{0}', space=sflag, size = 0x4, scoped, tag = 'scoped memory for _vae_forward_impl.1']
    %17 = vsyncpa [#allocation3], 0
    // Predicated region
    $region2: #{_vae_forward_impl.1} parent=1 // pred_check
      _
    $region3: #{_vae_forward_impl.1} parent=1 // pred_check_branch
      %19 = sbr.rel (0) target = $region5
    $region4: #{_vae_forward_impl.1} parent=1 // pred_region
      _
    $region5: #{_vae_forward_impl.1} parent=1 // pred_fallthru
      _
    // Predicated region
    $region6: #{_vae_forward_impl.1} parent=1 // pred_check
      _
    $region7: #{_vae_forward_impl.1} parent=1 // pred_check_branch
      %21 = sbr.rel (0) target = $region9
    $region8: #{_vae_forward_impl.1} parent=1 // pred_region
      _
    $region9: #{_vae_forward_impl.1} parent=1 // pred_fallthru
      _
    // Predicated region
    $region10: #{_vae_forward_impl.1} parent=1 // pred_check
      _
    $region11: #{_vae_forward_impl.1} parent=1 // pred_check_branch
      %23 = sbr.rel (0) target = $region13
    $region12: #{_vae_forward_impl.1} parent=1 // pred_region
      _
    $region13: #{_vae_forward_impl.1} parent=1 // pred_fallthru
      _
    // Predicated region
    $region14: #{_vae_forward_impl.1} parent=1 // pred_check
      _
    $region15: #{_vae_forward_impl.1} parent=1 // pred_check_branch
      %25 = sbr.rel (0) target = $region17
    $region16: #{_vae_forward_impl.1} parent=1 // pred_region
      _
    $region17: #{_vae_forward_impl.1} parent=1 // pred_fallthru
      _
    // Predicated region
    $region18: #{_vae_forward_impl.1} parent=1 // pred_check
      _
    $region19: #{_vae_forward_impl.1} parent=1 // pred_check_branch
      %27 = sbr.rel (0) target = $region21
    $region20: #{_vae_forward_impl.1} parent=1 // pred_region
      _
    $region21: #{_vae_forward_impl.1} parent=1 // pred_fallthru
      _
    // Predicated region
    $region22: #{_vae_forward_impl.1} parent=1 // pred_check
      _
    $region23: #{_vae_forward_impl.1} parent=1 // pred_check_branch
      %29 = sbr.rel (0) target = $region25
    $region24: #{_vae_forward_impl.1} parent=1 // pred_region
      _
    $region25: #{_vae_forward_impl.1} parent=1 // pred_fallthru
      _
    // Predicated region
    $region26: #{_vae_forward_impl.1} parent=1 // pred_check
      _
    $region27: #{_vae_forward_impl.1} parent=1 // pred_check_branch
      %31 = sbr.rel (0) target = $region29
    $region28: #{_vae_forward_impl.1} parent=1 // pred_region
      _
    $region29: #{_vae_forward_impl.1} parent=1 // pred_fallthru
      _
    // Predicated region
    $region30: #{_vae_forward_impl.1} parent=1 // pred_check
      _
    $region31: #{_vae_forward_impl.1} parent=1 // pred_check_branch
      %33 = sbr.rel (0) target = $region33
    $region32: #{_vae_forward_impl.1} parent=1 // pred_region
      _
    $region33: #{_vae_forward_impl.1} parent=1 // pred_fallthru
      _
    // Predicated region
    $region34: #{_vae_forward_impl.1} parent=1 // pred_check
      _
    $region35: #{_vae_forward_impl.1} parent=1 // pred_check_branch
      %35 = sbr.rel (0) target = $region37
    $region36: #{_vae_forward_impl.1} parent=1 // pred_region
      _
    $region37: #{_vae_forward_impl.1} parent=1 // pred_fallthru
      _
    // Predicated region
    $region38: #{_vae_forward_impl.1} parent=1 // pred_check
      _
    $region39: #{_vae_forward_impl.1} parent=1 // pred_check_branch
      %37 = sbr.rel (0) target = $region41
    $region40: #{_vae_forward_impl.1} parent=1 // pred_region
      _
    $region41: #{_vae_forward_impl.1} parent=1 // pred_fallthru
      _
    %v39 = vld [vmem:[%s0] sm:$0xff]
    %v40 = vpack.c.bf16 %v39, %v39
    %v41 = vld [vmem:[%s2] sm:$0xf]
    %v42 = vld [vmem:[%s2 + $0x4] sm:$0xf]
    %v43 = vld [vmem:[%s2 + $0x8] sm:$0xf]
    %v44 = vld [vmem:[%s2 + $0xc] sm:$0xf]
    %v45 = vld [vmem:[%s2 + $0x10] sm:$0xf]
    %v46 = vld [vmem:[%s2 + $0x14] sm:$0xf]
    %v47 = vld [vmem:[%s2 + $0x18] sm:$0xf]
    %v48 = vld [vmem:[%s2 + $0x1c] sm:$0xf]
    %v49 = vld [vmem:[%s2 + $0x20] sm:$0xf]
    %v50 = vld [vmem:[%s2 + $0x24] sm:$0xf]
    %v51 = vld [vmem:[%s2 + $0x28] sm:$0xf]
    %v52 = vld [vmem:[%s2 + $0x2c] sm:$0xf]
    %v53 = vld [vmem:[%s2 + $0x30] sm:$0xf]
    %v54 = vld [vmem:[%s2 + $0x34] sm:$0xf]
    %v55 = vld [vmem:[%s2 + $0x38] sm:$0xf]
    %v56 = vld [vmem:[%s2 + $0x3c] sm:$0xf]
    %v57 = vld [vmem:[%s3] sm:$0x1]
    %v59 = vlaneseq
    %v60 = vshrl.u32 %v59, 7
    %v61 = vsub.s32 0, %v60
    %v62 = vrot.slane %v57, %v61
    %v80 = vunpack.c.l.b16 %v41
    %v81 = vunpack.c.l.b16 %v42
    %v82 = vunpack.c.l.b16 %v43
    %v83 = vunpack.c.l.b16 %v44
    %v84 = vunpack.c.l.b16 %v45
    %v85 = vunpack.c.l.b16 %v46
    %v86 = vunpack.c.l.b16 %v47
    %v87 = vunpack.c.l.b16 %v48
    %v88 = vunpack.c.l.b16 %v49
    %v89 = vunpack.c.l.b16 %v50
    %v90 = vunpack.c.l.b16 %v51
    %v91 = vunpack.c.l.b16 %v52
    %v92 = vunpack.c.l.b16 %v53
    %v93 = vunpack.c.l.b16 %v54
    %v94 = vunpack.c.l.b16 %v55
    %v95 = vunpack.c.l.b16 %v56
    %v96 = vpack.c.b16 %v81, %v80
    %v97 = vpack.c.b16 %v83, %v82
    %v98 = vpack.c.b16 %v85, %v84
    %v99 = vpack.c.b16 %v87, %v86
    %v100 = vpack.c.b16 %v89, %v88
    %v101 = vpack.c.b16 %v91, %v90
    %v102 = vpack.c.b16 %v93, %v92
    %v103 = vpack.c.b16 %v95, %v94
    %112 = vmatprep.subr.bf16.mxu0 0
    %113 = vmatpush1.bf16.msra.mxu0 %v96
    %114 = vmatprep.subr.bf16.mxu0 0
    %115 = vmatpush1.bf16.msra.mxu0 %v97
    %116 = vmatprep.subr.bf16.mxu0 0
    %117 = vmatpush1.bf16.msra.mxu0 %v98
    %118 = vmatprep.subr.bf16.mxu0 0
    %119 = vmatpush1.bf16.msra.mxu0 %v99
    %120 = vmatprep.subr.bf16.mxu0 0
    %121 = vmatpush1.bf16.msra.mxu0 %v100
    %122 = vmatprep.subr.bf16.mxu0 0
    %123 = vmatpush1.bf16.msra.mxu0 %v101
    %124 = vmatprep.subr.bf16.mxu0 0
    %125 = vmatpush1.bf16.msra.mxu0 %v102
    %126 = vmatprep.subr.bf16.mxu0 0
    %127 = vmatpush1.bf16.msra.mxu0 %v103
    %128 = vmatprep.subr.bf16.mxu0 0
    %129 = vmatpush1.bf16.msra.mxu0 0
    %130 = vmatprep.subr.bf16.mxu0 0
    %131 = vmatpush1.bf16.msra.mxu0 0
    %132 = vmatprep.subr.bf16.mxu0 0
    %133 = vmatpush1.bf16.msra.mxu0 0
    %134 = vmatprep.subr.bf16.mxu0 0
    %135 = vmatpush1.bf16.msra.mxu0 0
    %136 = vmatprep.subr.bf16.mxu0 0
    %137 = vmatpush1.bf16.msra.mxu0 0
    %138 = vmatprep.subr.bf16.mxu0 0
    %139 = vmatpush1.bf16.msra.mxu0 0
    %140 = vmatprep.subr.bf16.mxu0 0
    %141 = vmatpush1.bf16.msra.mxu0 0
    %142 = vmatprep.subr.bf16.mxu0 0
    %143 = vmatpush1.bf16.msra.mxu0 0
    %144 = vmatprep.mubr.bf16.mxu0 0
    %145 = vmatmul.mubr.bf16.gmra.mrb[0].mxu0 %v40
    %v146 = vpop.f32.mrb[0].mxu0
    %v147 = vadd.f32 %v62, %v146
    %v148 = vpop.f32.mrb[0].mxu0
    %v149 = vpop.f32.mrb[0].mxu0
    %v150 = vpop.f32.mrb[0].mxu0
    %151 = vdwg.mxu0
    %v152 = vmax.f32 %v147, 0.0
    %v153 = vpack.c.bf16 %v152, %v152
    %v154 = vld [vmem:[%s4] sm:$0xff]
    %v155 = vld [vmem:[%s4 + $0x8] sm:$0xff]
    %v156 = vld [vmem:[%s4 + $0x10] sm:$0xff]
    %v157 = vld [vmem:[%s4 + $0x18] sm:$0xff]
    %v158 = vld [vmem:[%s4 + $0x20] sm:$0xff]
    %v159 = vld [vmem:[%s4 + $0x28] sm:$0xff]
    %v160 = vld [vmem:[%s4 + $0x30] sm:$0xff]
    %v161 = vld [vmem:[%s4 + $0x38] sm:$0xff]
    %v162 = vld [vmem:[%s4 + $0x40] sm:$0xff]
    %v163 = vld [vmem:[%s4 + $0x48] sm:$0xff]
    %v164 = vld [vmem:[%s4 + $0x50] sm:$0xff]
    %v165 = vld [vmem:[%s4 + $0x58] sm:$0xff]
    %v166 = vld [vmem:[%s4 + $0x60] sm:$0xff]
    %v167 = vld [vmem:[%s4 + $0x68] sm:$0xff]
    %v168 = vld [vmem:[%s4 + $0x70] sm:$0xff]
    %v169 = vld [vmem:[%s4 + $0x78] sm:$0xff]
    %v170 = vld [vmem:[%s5] sm:$0x3]
    %v172 = vlaneseq
    %v173 = vshrl.u32 %v172, 7
    %v174 = vsub.s32 0, %v173
    %v175 = vrot.slane %v170, %v174
    %v176 = vlaneseq
    %v177 = vshrl.u32 %v176, 7
    %v178 = vsub.s32 1, %v177
    %v179 = vrot.slane %v170, %v178
    %v198 = vunpack.c.l.b16 %v154
    %v199 = vunpack.c.h.b16 %v154
    %v200 = vunpack.c.l.b16 %v155
    %v201 = vunpack.c.h.b16 %v155
    %v202 = vunpack.c.l.b16 %v156
    %v203 = vunpack.c.h.b16 %v156
    %v204 = vunpack.c.l.b16 %v157
    %v205 = vunpack.c.h.b16 %v157
    %v206 = vunpack.c.l.b16 %v158
    %v207 = vunpack.c.h.b16 %v158
    %v208 = vunpack.c.l.b16 %v159
    %v209 = vunpack.c.h.b16 %v159
    %v210 = vunpack.c.l.b16 %v160
    %v211 = vunpack.c.h.b16 %v160
    %v212 = vunpack.c.l.b16 %v161
    %v213 = vunpack.c.h.b16 %v161
    %v214 = vunpack.c.l.b16 %v162
    %v215 = vunpack.c.h.b16 %v162
    %v216 = vunpack.c.l.b16 %v163
    %v217 = vunpack.c.h.b16 %v163
    %v218 = vunpack.c.l.b16 %v164
    %v219 = vunpack.c.h.b16 %v164
    %v220 = vunpack.c.l.b16 %v165
    %v221 = vunpack.c.h.b16 %v165
    %v222 = vunpack.c.l.b16 %v166
    %v223 = vunpack.c.h.b16 %v166
    %v224 = vunpack.c.l.b16 %v167
    %v225 = vunpack.c.h.b16 %v167
    %v226 = vunpack.c.l.b16 %v168
    %v227 = vunpack.c.h.b16 %v168
    %v228 = vunpack.c.l.b16 %v169
    %v229 = vunpack.c.h.b16 %v169
    %v230 = vpack.c.b16 %v200, %v198
    %v231 = vpack.c.b16 %v201, %v199
    %v232 = vpack.c.b16 %v204, %v202
    %v233 = vpack.c.b16 %v205, %v203
    %v234 = vpack.c.b16 %v208, %v206
    %v235 = vpack.c.b16 %v209, %v207
    %v236 = vpack.c.b16 %v212, %v210
    %v237 = vpack.c.b16 %v213, %v211
    %v238 = vpack.c.b16 %v216, %v214
    %v239 = vpack.c.b16 %v217, %v215
    %v240 = vpack.c.b16 %v220, %v218
    %v241 = vpack.c.b16 %v221, %v219
    %v242 = vpack.c.b16 %v224, %v222
    %v243 = vpack.c.b16 %v225, %v223
    %v244 = vpack.c.b16 %v228, %v226
    %v245 = vpack.c.b16 %v229, %v227
    %262 = vmatprep.subr.bf16.mxu0 %v231
    %263 = vmatpush1.bf16.msra.mxu0 %v230
    %264 = vmatprep.subr.bf16.mxu0 %v233
    %265 = vmatpush1.bf16.msra.mxu0 %v232
    %266 = vmatprep.subr.bf16.mxu0 %v235
    %267 = vmatpush1.bf16.msra.mxu0 %v234
    %268 = vmatprep.subr.bf16.mxu0 %v237
    %269 = vmatpush1.bf16.msra.mxu0 %v236
    %270 = vmatprep.subr.bf16.mxu0 %v239
    %271 = vmatpush1.bf16.msra.mxu0 %v238
    %272 = vmatprep.subr.bf16.mxu0 %v241
    %273 = vmatpush1.bf16.msra.mxu0 %v240
    %274 = vmatprep.subr.bf16.mxu0 %v243
    %275 = vmatpush1.bf16.msra.mxu0 %v242
    %276 = vmatprep.subr.bf16.mxu0 %v245
    %277 = vmatpush1.bf16.msra.mxu0 %v244
    %278 = vmatprep.subr.bf16.mxu0 0
    %279 = vmatpush1.bf16.msra.mxu0 0
    %280 = vmatprep.subr.bf16.mxu0 0
    %281 = vmatpush1.bf16.msra.mxu0 0
    %282 = vmatprep.subr.bf16.mxu0 0
    %283 = vmatpush1.bf16.msra.mxu0 0
    %284 = vmatprep.subr.bf16.mxu0 0
    %285 = vmatpush1.bf16.msra.mxu0 0
    %286 = vmatprep.subr.bf16.mxu0 0
    %287 = vmatpush1.bf16.msra.mxu0 0
    %288 = vmatprep.subr.bf16.mxu0 0
    %289 = vmatpush1.bf16.msra.mxu0 0
    %290 = vmatprep.subr.bf16.mxu0 0
    %291 = vmatpush1.bf16.msra.mxu0 0
    %292 = vmatprep.subr.bf16.mxu0 0
    %293 = vmatpush1.bf16.msra.mxu0 0
    %294 = vmatprep.mubr.bf16.mxu0 0
    %295 = vmatmul.mubr.bf16.gmra.mrb[0].mxu0 %v153
    %v296 = vpop.f32.mrb[0].mxu0
    %v297 = vadd.f32 %v175, %v296
    %v298 = vpop.f32.mrb[0].mxu0
    %v299 = vadd.f32 %v179, %v298
    %v300 = vpop.f32.mrb[0].mxu0
    %v301 = vpop.f32.mrb[0].mxu0
    %302 = vdwg.mxu0
    %v303 = vld [vmem:[%s1] sm:$0xff]
    %v304 = vmul.f32 %v299, 0.5
    %v305 = vmul.f32 %v304, 1.442695
    %v306 = vpow.pop %v305
    %v307 = vmul.f32 %v303, %v306
    %v308 = vadd.f32 %v307, %v297
    %v309 = vpack.c.bf16 %v308, %v308
    %v310 = vld [vmem:[%s6] sm:$0xf]
    %v311 = vld [vmem:[%s6 + $0x4] sm:$0xf]
    %v312 = vld [vmem:[%s6 + $0x8] sm:$0xf]
    %v313 = vld [vmem:[%s6 + $0xc] sm:$0xf]
    %v314 = vld [vmem:[%s6 + $0x10] sm:$0xf]
    %v315 = vld [vmem:[%s6 + $0x14] sm:$0xf]
    %v316 = vld [vmem:[%s6 + $0x18] sm:$0xf]
    %v317 = vld [vmem:[%s6 + $0x1c] sm:$0xf]
    %v318 = vld [vmem:[%s6 + $0x20] sm:$0xf]
    %v319 = vld [vmem:[%s6 + $0x24] sm:$0xf]
    %v320 = vld [vmem:[%s6 + $0x28] sm:$0xf]
    %v321 = vld [vmem:[%s6 + $0x2c] sm:$0xf]
    %v322 = vld [vmem:[%s6 + $0x30] sm:$0xf]
    %v323 = vld [vmem:[%s6 + $0x34] sm:$0xf]
    %v324 = vld [vmem:[%s6 + $0x38] sm:$0xf]
    %v325 = vld [vmem:[%s6 + $0x3c] sm:$0xf]
    %v326 = vld [vmem:[%s7] sm:$0x1]
    %v328 = vlaneseq
    %v329 = vshrl.u32 %v328, 7
    %v330 = vsub.s32 0, %v329
    %v331 = vrot.slane %v326, %v330
    %v349 = vunpack.c.l.b16 %v310
    %v350 = vunpack.c.l.b16 %v311
    %v351 = vunpack.c.l.b16 %v312
    %v352 = vunpack.c.l.b16 %v313
    %v353 = vunpack.c.l.b16 %v314
    %v354 = vunpack.c.l.b16 %v315
    %v355 = vunpack.c.l.b16 %v316
    %v356 = vunpack.c.l.b16 %v317
    %v357 = vunpack.c.l.b16 %v318
    %v358 = vunpack.c.l.b16 %v319
    %v359 = vunpack.c.l.b16 %v320
    %v360 = vunpack.c.l.b16 %v321
    %v361 = vunpack.c.l.b16 %v322
    %v362 = vunpack.c.l.b16 %v323
    %v363 = vunpack.c.l.b16 %v324
    %v364 = vunpack.c.l.b16 %v325
    %v365 = vpack.c.b16 %v350, %v349
    %v366 = vpack.c.b16 %v352, %v351
    %v367 = vpack.c.b16 %v354, %v353
    %v368 = vpack.c.b16 %v356, %v355
    %v369 = vpack.c.b16 %v358, %v357
    %v370 = vpack.c.b16 %v360, %v359
    %v371 = vpack.c.b16 %v362, %v361
    %v372 = vpack.c.b16 %v364, %v363
    %381 = vmatprep.subr.bf16.mxu0 0
    %382 = vmatpush1.bf16.msra.mxu0 %v365
    %383 = vmatprep.subr.bf16.mxu0 0
    %384 = vmatpush1.bf16.msra.mxu0 %v366
    %385 = vmatprep.subr.bf16.mxu0 0
    %386 = vmatpush1.bf16.msra.mxu0 %v367
    %387 = vmatprep.subr.bf16.mxu0 0
    %388 = vmatpush1.bf16.msra.mxu0 %v368
    %389 = vmatprep.subr.bf16.mxu0 0
    %390 = vmatpush1.bf16.msra.mxu0 %v369
    %391 = vmatprep.subr.bf16.mxu0 0
    %392 = vmatpush1.bf16.msra.mxu0 %v370
    %393 = vmatprep.subr.bf16.mxu0 0
    %394 = vmatpush1.bf16.msra.mxu0 %v371
    %395 = vmatprep.subr.bf16.mxu0 0
    %396 = vmatpush1.bf16.msra.mxu0 %v372
    %397 = vmatprep.subr.bf16.mxu0 0
    %398 = vmatpush1.bf16.msra.mxu0 0
    %399 = vmatprep.subr.bf16.mxu0 0
    %400 = vmatpush1.bf16.msra.mxu0 0
    %401 = vmatprep.subr.bf16.mxu0 0
    %402 = vmatpush1.bf16.msra.mxu0 0
    %403 = vmatprep.subr.bf16.mxu0 0
    %404 = vmatpush1.bf16.msra.mxu0 0
    %405 = vmatprep.subr.bf16.mxu0 0
    %406 = vmatpush1.bf16.msra.mxu0 0
    %407 = vmatprep.subr.bf16.mxu0 0
    %408 = vmatpush1.bf16.msra.mxu0 0
    %409 = vmatprep.subr.bf16.mxu0 0
    %410 = vmatpush1.bf16.msra.mxu0 0
    %411 = vmatprep.subr.bf16.mxu0 0
    %412 = vmatpush1.bf16.msra.mxu0 0
    %413 = vmatprep.mubr.bf16.mxu0 0
    %414 = vmatmul.mubr.bf16.gmra.mrb[0].mxu0 %v309
    %v415 = vpop.f32.mrb[0].mxu0
    %v416 = vadd.f32 %v331, %v415
    %v417 = vpop.f32.mrb[0].mxu0
    %v418 = vpop.f32.mrb[0].mxu0
    %v419 = vpop.f32.mrb[0].mxu0
    %420 = vdwg.mxu0
    %v421 = vmax.f32 %v416, 0.0
    %v422 = vpack.c.bf16 %v421, %v421
    %v423 = vld [vmem:[%s8] sm:$0xf]
    %v424 = vld [vmem:[%s8 + $0x4] sm:$0xf]
    %v425 = vld [vmem:[%s8 + $0x8] sm:$0xf]
    %v426 = vld [vmem:[%s8 + $0xc] sm:$0xf]
    %v427 = vld [vmem:[%s8 + $0x10] sm:$0xf]
    %v428 = vld [vmem:[%s8 + $0x14] sm:$0xf]
    %v429 = vld [vmem:[%s8 + $0x18] sm:$0xf]
    %v430 = vld [vmem:[%s8 + $0x1c] sm:$0xf]
    %v431 = vld [vmem:[%s8 + $0x20] sm:$0xf]
    %v432 = vld [vmem:[%s8 + $0x24] sm:$0xf]
    %v433 = vld [vmem:[%s8 + $0x28] sm:$0xf]
    %v434 = vld [vmem:[%s8 + $0x2c] sm:$0xf]
    %v435 = vld [vmem:[%s8 + $0x30] sm:$0xf]
    %v436 = vld [vmem:[%s8 + $0x34] sm:$0xf]
    %v437 = vld [vmem:[%s8 + $0x38] sm:$0xf]
    %v438 = vld [vmem:[%s8 + $0x3c] sm:$0xf]
    %v439 = vld [vmem:[%s9] sm:$0x1]
    %v441 = vlaneseq
    %v442 = vshrl.u32 %v441, 7
    %v443 = vsub.s32 0, %v442
    %v444 = vrot.slane %v439, %v443
    %v462 = vunpack.c.l.b16 %v423
    %v463 = vunpack.c.l.b16 %v424
    %v464 = vunpack.c.l.b16 %v425
    %v465 = vunpack.c.l.b16 %v426
    %v466 = vunpack.c.l.b16 %v427
    %v467 = vunpack.c.l.b16 %v428
    %v468 = vunpack.c.l.b16 %v429
    %v469 = vunpack.c.l.b16 %v430
    %v470 = vunpack.c.l.b16 %v431
    %v471 = vunpack.c.l.b16 %v432
    %v472 = vunpack.c.l.b16 %v433
    %v473 = vunpack.c.l.b16 %v434
    %v474 = vunpack.c.l.b16 %v435
    %v475 = vunpack.c.l.b16 %v436
    %v476 = vunpack.c.l.b16 %v437
    %v477 = vunpack.c.l.b16 %v438
    %v478 = vpack.c.b16 %v463, %v462
    %v479 = vpack.c.b16 %v465, %v464
    %v480 = vpack.c.b16 %v467, %v466
    %v481 = vpack.c.b16 %v469, %v468
    %v482 = vpack.c.b16 %v471, %v470
    %v483 = vpack.c.b16 %v473, %v472
    %v484 = vpack.c.b16 %v475, %v474
    %v485 = vpack.c.b16 %v477, %v476
    %494 = vmatprep.subr.bf16.mxu0 0
    %495 = vmatpush1.bf16.msra.mxu0 %v478
    %496 = vmatprep.subr.bf16.mxu0 0
    %497 = vmatpush1.bf16.msra.mxu0 %v479
    %498 = vmatprep.subr.bf16.mxu0 0
    %499 = vmatpush1.bf16.msra.mxu0 %v480
    %500 = vmatprep.subr.bf16.mxu0 0
    %501 = vmatpush1.bf16.msra.mxu0 %v481
    %502 = vmatprep.subr.bf16.mxu0 0
    %503 = vmatpush1.bf16.msra.mxu0 %v482
    %504 = vmatprep.subr.bf16.mxu0 0
    %505 = vmatpush1.bf16.msra.mxu0 %v483
    %506 = vmatprep.subr.bf16.mxu0 0
    %507 = vmatpush1.bf16.msra.mxu0 %v484
    %508 = vmatprep.subr.bf16.mxu0 0
    %509 = vmatpush1.bf16.msra.mxu0 %v485
    %510 = vmatprep.subr.bf16.mxu0 0
    %511 = vmatpush1.bf16.msra.mxu0 0
    %512 = vmatprep.subr.bf16.mxu0 0
    %513 = vmatpush1.bf16.msra.mxu0 0
    %514 = vmatprep.subr.bf16.mxu0 0
    %515 = vmatpush1.bf16.msra.mxu0 0
    %516 = vmatprep.subr.bf16.mxu0 0
    %517 = vmatpush1.bf16.msra.mxu0 0
    %518 = vmatprep.subr.bf16.mxu0 0
    %519 = vmatpush1.bf16.msra.mxu0 0
    %520 = vmatprep.subr.bf16.mxu0 0
    %521 = vmatpush1.bf16.msra.mxu0 0
    %522 = vmatprep.subr.bf16.mxu0 0
    %523 = vmatpush1.bf16.msra.mxu0 0
    %524 = vmatprep.subr.bf16.mxu0 0
    %525 = vmatpush1.bf16.msra.mxu0 0
    %526 = vmatprep.mubr.bf16.mxu0 0
    %527 = vmatmul.mubr.bf16.gmra.mrb[0].mxu0 %v422
    %v528 = vpop.f32.mrb[0].mxu0
    %v529 = vadd.f32 %v444, %v528
    %v530 = vpop.f32.mrb[0].mxu0
    %v531 = vpop.f32.mrb[0].mxu0
    %v532 = vpop.f32.mrb[0].mxu0
    %533 = vdwg.mxu0
    %534 = vst [vmem:[#allocation2] sm:$0xff] %v529
    %535 = vst [vmem:[%s11] sm:$0xff] %v297
    %536 = vst [vmem:[%s11 + $0x8] sm:$0xff] %v299
    // Predicated region
    $region42: #{_vae_forward_impl.1} parent=1 // pred_check
      _
    $region43: #{_vae_forward_impl.1} parent=1 // pred_check_branch
      %538 = sbr.rel (0) target = $region45
    $region44: #{_vae_forward_impl.1} parent=1 // pred_region
      %s540 = ssub.s32 128, 128
      %541 = vsyncadd [#allocation3], %s540
      %s543 = sshll.u32 [#allocation2], 4
      %s544 = int_to_ptr.vmem [resolvable:$true] %s543
      %546 = dma.vmem_to_hbm [thread:$0]  %s544, 128, %s10, [#allocation3]
    $region45: #{_vae_forward_impl.1} parent=1 // pred_fallthru
      _
    // Predicated region
    $region46: #{_vae_forward_impl.1} parent=1 // pred_check
      _
    $region47: #{_vae_forward_impl.1} parent=1 // pred_check_branch
      %548 = sbr.rel (0) target = $region49
    $region48: #{_vae_forward_impl.1} parent=1 // pred_region
      _
    $region49: #{_vae_forward_impl.1} parent=1 // pred_fallthru
      _
    // Predicated region
    $region50: #{_vae_forward_impl.1} parent=1 // pred_check
      _
    $region51: #{_vae_forward_impl.1} parent=1 // pred_check_branch
      %550 = sbr.rel (0) target = $region53
    $region52: #{_vae_forward_impl.1} parent=1 // pred_region
      %551 = dma.done [#allocation3], 128
    $region53: #{_vae_forward_impl.1} parent=1 // pred_fallthru
      _
    // Predicated region
    $region54: #{_vae_forward_impl.1} parent=1 // pred_check
      _
    $region55: #{_vae_forward_impl.1} parent=1 // pred_check_branch
      %553 = sbr.rel (0) target = $region57
    $region56: #{_vae_forward_impl.1} parent=1 // pred_region
      _
    $region57: #{_vae_forward_impl.1} parent=1 // pred_fallthru
      _
    %554 = vsyncpa [#allocation3], 1

</llo_original>
